<compile_context>
chip_gen: v7x
topology: tpu7x:2x2x1
jax: 0.10.0
libtpu: 0.0.40
codegen_flags: <defaults>
</compile_context>

<pallas_src>
import numpy as np
import jax
import jax.numpy as jnp
from jax import lax
from jax.experimental import pallas as pl
from jax.experimental.pallas import tpu as pltpu

_LANES = 128
_TILE_GROUPS = 1024        # groups per grid step (4 MiB f32 per input block)
_CHUNK_BYTES = 64 * 1024   # per-chunk f32 working set inside the kernel (~16 vregs)
_SPLIT_MIN_GROUPS = 128    # >= this many groups: force num_tiles >= 2 (v7x 2-TC sharding)
_PALLAS_MIN_ELEMS = 65536  # below this, plain jnp beats a kernel launch + epilogue


def _sublanes_for(dtype) -> int:
    # Packed sublane count so sub-32-bit inputs stay dense on the wire (bf16 -> (16,128)).
    return {4: 8, 2: 16, 1: 32}.get(np.dtype(dtype).itemsize, 8)


def _make_sse_kernel(tile_groups: int, total_groups: int, sublanes: int, const: float):
    """Per-tile partial sums of (x - const)^2 over the block's leading (group) axis."""
    num_tiles = -(-total_groups // tile_groups)
    last_groups = total_groups - (num_tiles - 1) * tile_groups   # valid groups in final tile
    chunk = max(1, _CHUNK_BYTES // (sublanes * _LANES * 4))

    def partial_sum(x_ref, n_groups):
        # Sum over the first n_groups groups, chunked so temporaries stay at vreg scale.
        c = min(chunk, n_groups)
        n_full = n_groups // c
        rem = n_groups - n_full * c

        def chunk_sse(start, size):
            blk = x_ref[pl.ds(start, size), :, :].astype(jnp.float32)  # (size, sublanes, 128)
            d = blk - const
            return jnp.sum(d * d, axis=0)                              # (sublanes, 128)

        def body(i, acc):
            return acc + chunk_sse(pl.multiple_of(i * c, c), c)

        acc = lax.fori_loop(0, n_full, body, jnp.zeros((sublanes, _LANES), jnp.float32))
        if rem:
            acc = acc + chunk_sse(n_full * c, rem)
        return acc

    def kernel(x_ref, out_ref):
        if last_groups == tile_groups:
            # All tiles full: single unmasked path.
            out_ref[...] = partial_sum(x_ref, tile_groups)
        else:
            is_last = pl.program_id(0) == num_tiles - 1

            @pl.when(pl.program_id(0) != num_tiles - 1)
            def _():
                out_ref[...] = partial_sum(x_ref, tile_groups)

            @pl.when(is_last)
            def _():
                # Static slice bound: out-of-range rows of the final (partial) block are
                # never read, so no garbage can propagate and no per-element mask is needed.
                out_ref[...] = partial_sum(x_ref, last_groups)

    return kernel


def _mse_to_const(x, const):
    """mean((x - const)^2) for one score map (const = 1.0 for real, 0.0 for fake)."""
    n = int(np.prod(x.shape))
    sublanes = _sublanes_for(x.dtype)
    group = sublanes * _LANES

    if n < _PALLAS_MIN_ELEMS or n % group != 0:
        # Small maps: launch/epilogue overhead dominates -> let XLA fuse all scales.
        # Ragged maps: stay zero-copy via XLA's fused reduction instead of materializing a
        # padded HBM copy of the whole tensor.
        # TODO(synk): a manual-DMA (pl.ANY) path could cover large ragged sizes in-kernel.
        d = x.astype(jnp.float32) - const
        return jnp.mean(d * d)

    total_groups = n // group
    x3d = jnp.reshape(x, (total_groups, sublanes, _LANES))   # zero-copy lane/sublane-dense view

    tile_cap = _TILE_GROUPS
    if total_groups >= _SPLIT_MIN_GROUPS:
        # Ensure num_tiles >= 2 so the "parallel" grid axis can shard across v7x's two TCs.
        half = ((-(-total_groups // 2) + 7) // 8) * 8
        tile_cap = min(tile_cap, half)
    tile_groups = min(total_groups, tile_cap)
    num_tiles = -(-total_groups // tile_groups)

    kernel = _make_sse_kernel(tile_groups, total_groups, sublanes, float(const))

    partials = pl.pallas_call(
        kernel,
        out_shape=jax.ShapeDtypeStruct((num_tiles, sublanes, _LANES), jnp.float32),
        grid=(num_tiles,),
        in_specs=[pl.BlockSpec((tile_groups, sublanes, _LANES), lambda i: (i, 0, 0))],
        out_specs=pl.BlockSpec((None, sublanes, _LANES), lambda i: (i, 0, 0)),
        compiler_params=pltpu.CompilerParams(dimension_semantics=("parallel",)),
        cost_estimate=pl.CostEstimate(
            flops=3 * n,
            transcendentals=0,
            bytes_accessed=n * np.dtype(x.dtype).itemsize + num_tiles * sublanes * _LANES * 4,
        ),
    )(x3d)

    # Tiny epilogue: cross-lane/sublane/tile sum of the partials + one 1/n scale.
    return jnp.sum(partials) * jnp.float32(1.0 / n)


def adversarial_loss(real_scores, fake_scores):
    """sum_i [ mean((real_i - 1)^2) + mean(fake_i^2) ]  (labels are constants 1 / 0)."""
    assert len(real_scores) == len(fake_scores) and len(real_scores) > 0
    loss = jnp.float32(0.0)
    for r, f in zip(real_scores, fake_scores):
        loss = loss + _mse_to_const(r, 1.0) + _mse_to_const(f, 0.0)
    return loss


def discriminator_loss(real_scores, fake_scores, **batch):
    """real_scores / fake_scores: lists of score maps (e.g. NCHW); shapes may differ per scale."""
    adv = adversarial_loss(real_scores, fake_scores)
    return {"discriminator_loss": adv, "d_adv_loss": adv}


def _reference(real_scores, fake_scores):
    loss = jnp.float32(0.0)
    for r, f in zip(real_scores, fake_scores):
        loss = loss + jnp.mean((r.astype(jnp.float32) - 1.0) ** 2) \
                    + jnp.mean(f.astype(jnp.float32) ** 2)
    return loss


if __name__ == "__main__":
    key = jax.random.PRNGKey(0)
    # Multi-scale discriminator score maps (NCHW). Scale 0 exercises the Pallas path with
    # 2 tiles + a partial last tile; scale 1 the single-tile path; scale 2 the bf16
    # 16-sublane packed path; scale 3 the small-map jnp fast path.
    shapes_dtypes = [
        ((2, 4, 136, 128), jnp.float32),   # 139264 elems -> 136 groups -> tiles of 72 (last partial)
        ((2, 4, 64, 128), jnp.float32),    # 65536 elems  -> 64 groups  -> 1 tile
        ((2, 4, 128, 128), jnp.bfloat16),  # 131072 elems -> 64 bf16 groups (16, 128 blocks)
        ((2, 4, 16, 16), jnp.float32),     # 2048 elems   -> jnp fast path
    ]
    keys = jax.random.split(key, 2 * len(shapes_dtypes))
    real_scores = [jax.random.normal(keys[i], s, dtype=dt)
                   for i, (s, dt) in enumerate(shapes_dtypes)]
    fake_scores = [jax.random.normal(keys[len(shapes_dtypes) + i], s, dtype=dt)
                   for i, (s, dt) in enumerate(shapes_dtypes)]

    out = discriminator_loss(real_scores=real_scores, fake_scores=fake_scores)
    out = jax.tree_util.tree_map(jax.block_until_ready, out)

    ref = jax.block_until_ready(_reference(real_scores, fake_scores))
    np.testing.assert_allclose(np.asarray(out["discriminator_loss"], dtype=np.float32),
                               np.asarray(ref, dtype=np.float32), rtol=1e-5, atol=1e-5)
    assert np.asarray(out["d_adv_loss"]) == np.asarray(out["discriminator_loss"])

    print("KERNEL_OK")
</pallas_src>

<mosaic_0001>
module attributes {stable_mosaic.version = 11 : i64} {
  func.func @kernel(%arg0: i32, %arg1: memref<72x8x128xf32, #tpu.memory_space<vmem>>, %arg2: memref<1x8x128xf32, #tpu.memory_space<vmem>>) attributes {dimension_semantics = [#tpu.dimension_semantics<parallel>], iteration_bounds = array<i64: 2>, scalar_prefetch = 0 : i64, scratch_operands = 0 : i64, tpu.core_type = #tpu.core_type<tc>, window_params = [{transform_indices = @transform_0, window_bounds = array<i64: 72, 8, 128>}, {transform_indices = @transform_1, window_bounds = array<i64: 1, 8, 128>}]} {
    %c1_i32 = arith.constant 1 : i32
    %0 = arith.cmpi eq, %arg0, %c1_i32 : i32
    %c1_i32_0 = arith.constant 1 : i32
    %1 = arith.cmpi ne, %arg0, %c1_i32_0 : i32
    %2 = arith.extui %1 : i1 to i32
    %c0_i32 = arith.constant 0 : i32
    %3 = arith.cmpi ne, %2, %c0_i32 : i32
    scf.if %3 {
      %cst = arith.constant 0.000000e+00 : f32
      %6 = vector.broadcast %cst : f32 to vector<8x128xf32>
      %c0_i32_2 = arith.constant 0 : i32
      %c4_i32 = arith.constant 4 : i32
      %7 = arith.addi %c0_i32_2, %c4_i32 : i32
      %c1_i32_3 = arith.constant 1 : i32
      %8 = scf.for %arg3 = %c0_i32_2 to %7 step %c1_i32_3 iter_args(%arg4 = %6) -> (vector<8x128xf32>)  : i32 {
        %c16_i32 = arith.constant 16 : i32
        %18 = arith.muli %arg3, %c16_i32 : i32
        %19 = tpu.assume_multiple %18, 16 : i32
        %20 = arith.index_cast %19 : i32 to index
        %c0_11 = arith.constant 0 : index
        %c0_12 = arith.constant 0 : index
        %21 = vector.load %arg1[%20, %c0_11, %c0_12] : memref<72x8x128xf32, #tpu.memory_space<vmem>>, vector<16x8x128xf32>
        %cst_13 = arith.constant 1.000000e+00 : f32
        %22 = vector.broadcast %cst_13 : f32 to vector<16x8x128xf32>
        %23 = arith.subf %21, %22 : vector<16x8x128xf32>
        %24 = arith.mulf %23, %23 : vector<16x8x128xf32>
        %cst_14 = arith.constant dense<0.000000e+00> : vector<8x128xf32>
        %25 = vector.multi_reduction <add>, %24, %cst_14 [0] : vector<16x8x128xf32> to vector<8x128xf32>
        %26 = arith.addf %arg4, %25 : vector<8x128xf32>
        scf.yield %26 : vector<8x128xf32>
      }
      %c4_i32_4 = arith.constant 4 : i32
      %c64 = arith.constant 64 : index
      %c0 = arith.constant 0 : index
      %c0_5 = arith.constant 0 : index
      %9 = vector.load %arg1[%c64, %c0, %c0_5] : memref<72x8x128xf32, #tpu.memory_space<vmem>>, vector<8x8x128xf32>
      %cst_6 = arith.constant 1.000000e+00 : f32
      %10 = vector.broadcast %cst_6 : f32 to vector<8x8x128xf32>
      %11 = arith.subf %9, %10 : vector<8x8x128xf32>
      %12 = arith.mulf %11, %11 : vector<8x8x128xf32>
      %cst_7 = arith.constant dense<0.000000e+00> : vector<8x128xf32>
      %13 = vector.multi_reduction <add>, %12, %cst_7 [0] : vector<8x8x128xf32> to vector<8x128xf32>
      %14 = arith.addf %8, %13 : vector<8x128xf32>
      %c0_8 = arith.constant 0 : index
      %c0_9 = arith.constant 0 : index
      %c0_10 = arith.constant 0 : index
      %15 = vector.load %arg2[%c0_8, %c0_9, %c0_10] : memref<1x8x128xf32, #tpu.memory_space<vmem>>, vector<1x8x128xf32>
      %16 = vector.shape_cast %15 : vector<1x8x128xf32> to vector<8x128xf32>
      %17 = vector.shape_cast %14 : vector<8x128xf32> to vector<1x8x128xf32>
      tpu.vector_store %arg2[%c0_8, %c0_9, %c0_10], %17 {strides = array<i32>} : memref<1x8x128xf32, #tpu.memory_space<vmem>>, vector<1x8x128xf32>,
    } else {
    }
    %4 = arith.extui %0 : i1 to i32
    %c0_i32_1 = arith.constant 0 : i32
    %5 = arith.cmpi ne, %4, %c0_i32_1 : i32
    scf.if %5 {
      %cst = arith.constant 0.000000e+00 : f32
      %6 = vector.broadcast %cst : f32 to vector<8x128xf32>
      %c0_i32_2 = arith.constant 0 : i32
      %c4_i32 = arith.constant 4 : i32
      %7 = arith.addi %c0_i32_2, %c4_i32 : i32
      %c1_i32_3 = arith.constant 1 : i32
      %8 = scf.for %arg3 = %c0_i32_2 to %7 step %c1_i32_3 iter_args(%arg4 = %6) -> (vector<8x128xf32>)  : i32 {
        %c16_i32 = arith.constant 16 : i32
        %12 = arith.muli %arg3, %c16_i32 : i32
        %13 = tpu.assume_multiple %12, 16 : i32
        %14 = arith.index_cast %13 : i32 to index
        %c0_7 = arith.constant 0 : index
        %c0_8 = arith.constant 0 : index
        %15 = vector.load %arg1[%14, %c0_7, %c0_8] : memref<72x8x128xf32, #tpu.memory_space<vmem>>, vector<16x8x128xf32>
        %cst_9 = arith.constant 1.000000e+00 : f32
        %16 = vector.broadcast %cst_9 : f32 to vector<16x8x128xf32>
        %17 = arith.subf %15, %16 : vector<16x8x128xf32>
        %18 = arith.mulf %17, %17 : vector<16x8x128xf32>
        %cst_10 = arith.constant dense<0.000000e+00> : vector<8x128xf32>
        %19 = vector.multi_reduction <add>, %18, %cst_10 [0] : vector<16x8x128xf32> to vector<8x128xf32>
        %20 = arith.addf %arg4, %19 : vector<8x128xf32>
        scf.yield %20 : vector<8x128xf32>
      }
      %c4_i32_4 = arith.constant 4 : i32
      %c0 = arith.constant 0 : index
      %c0_5 = arith.constant 0 : index
      %c0_6 = arith.constant 0 : index
      %9 = vector.load %arg2[%c0, %c0_5, %c0_6] : memref<1x8x128xf32, #tpu.memory_space<vmem>>, vector<1x8x128xf32>
      %10 = vector.shape_cast %9 : vector<1x8x128xf32> to vector<8x128xf32>
      %11 = vector.shape_cast %8 : vector<8x128xf32> to vector<1x8x128xf32>
      tpu.vector_store %arg2[%c0, %c0_5, %c0_6], %11 {strides = array<i32>} : memref<1x8x128xf32, #tpu.memory_space<vmem>>, vector<1x8x128xf32>,
    } else {
    }
    return
  }
  func.func @transform_0(%arg0: i32) -> (i32, i32, i32) {
    %c0_i32 = arith.constant 0 : i32
    %c0_i32_0 = arith.constant 0 : i32
    %c0_i32_1 = arith.constant 0 : i32
    return %arg0, %c0_i32, %c0_i32_0 : i32, i32, i32
  }
  func.func @transform_1(%arg0: i32) -> (i32, i32, i32) {
    %c0_i32 = arith.constant 0 : i32
    %c0_i32_0 = arith.constant 0 : i32
    %c0_i32_1 = arith.constant 0 : i32
    return %arg0, %c0_i32, %c0_i32_0 : i32, i32, i32
  }
}

</mosaic_0001>

<llo_original>
// kernel: tpu_custom_call.1
$region0: #{tpu_custom_call.1}
  #allocation0 [shape = 'u32[]', space=smem, size = 0x4, offset = 0x4, fixed_abs, tag = 'smem constant byte address 0x4 - core index']
  #allocation1 [shape = 'u32[144,128]{1,0:T(1,128)}', space=vmem, size = 0x12000, scoped, tag = 'internal scratch']
  %s0 = inlined_call_operand.hbm [shape: f32[136,8,128], index: 0, kind: input, shape index: {}]
  %s1 = inlined_call_operand.hbm [shape: f32[2,8,128], index: 1, kind: output, shape index: {}]
  %s2 = sld [smem:[#allocation0]]
  $region63: #{tpu_custom_call.1} parent=0
    _
  %s4 = ssub.s32 1, %s2
  %s5 = scalar_select 0, %s4, %s2
  $region1: #{tpu_custom_call.1} parent=0
    #allocation2 [shape = 'u8[589824]{0}', space=vmem, size = 0x90000, scoped, tag = 'input window, operand 0']
    #allocation3 [shape = 's32[2]{0}', space=sflag, size = 0x8, scoped, tag = 'scoped memory for tpu_custom_call.1']
    #allocation4 [shape = 's32[2]{0}', space=sflag, size = 0x8, scoped, tag = 'scoped memory for tpu_custom_call.1']
    #allocation5 [shape = 'u8[8192]{0}', space=vmem, size = 0x2000, scoped, tag = 'output window, operand 0']
    %6 = vsyncpa [#allocation3], 0
    %s7 = scalar_lea.sflag [#allocation3], 1
    %8 = vsyncpa %s7, 0
    %9 = vsyncpa [#allocation4], 0
    %s10 = scalar_lea.sflag [#allocation4], 1
    %11 = vsyncpa %s10, 0
    loop: start=0, step=1, limit=4
    $region2: #{tpu_custom_call.1} parent=1 // loop_pre_header
      _
    $region3: #{tpu_custom_call.1} parent=1 // loop_header
      %s13 = sphi 0, %s17
      %p14 = scmp.ge.s32.totalorder %s13, 4
      %s23 = sphi 0, %s25
      %s26 = sphi 0, %s23
      %s27 = sphi 0, %s26
      %s43 = sphi 0, %s27
      %s49 = sphi 0, %s51
      %s52 = sphi 0, %s49
      %s53 = sphi 0, %s52
      %s69 = sphi 0, %s53
    $region4: #{tpu_custom_call.1} parent=1 // loop_header_branch
      %16 = sbr.rel (%p14) target = $region8
    $region5: #{tpu_custom_call.1} parent=1 // loop_body
      %s18 = ssub.s32 %s13, 1
      %s19 = ssub.s32 %s13, 2
      %s20 = sadd.s32 %s13, 1
      %s21 = ssub.s32 %s13, %s20
      %p22 = scmp.eq.s32.totalorder %s21, 0
      %s24 = sadd.s32 %s23, 1
      %s25 = scalar_select %p22, %s23, %s24
      %p28 = pneg %p22
      %p29 = scmp.eq.s32.totalorder %s13, 1
      %p30 = por %p28, %p29
      %p31 = scmp.ne.s32.totalorder %s23, %s26
      %p32 = scmp.eq.s32.totalorder %s13, 0
      %p33 = por %p31, %p32
      %p34 = scmp.ne.s32.totalorder %s23, %s26
      %p35 = scmp.eq.s32.totalorder %s18, 1
      %p36 = por %p34, %p35
      %p37 = scmp.ne.s32.totalorder %s26, %s27
      %p38 = scmp.eq.s32.totalorder %s18, 0
      %p39 = por %p37, %p38
      %p40 = scmp.ne.s32.totalorder %s26, %s27
      %p41 = scmp.eq.s32.totalorder %s19, 1
      %p42 = por %p40, %p41
      %p44 = scmp.ne.s32.totalorder %s27, %s43
      %p45 = scmp.eq.s32.totalorder %s19, 0
      %p46 = por %p44, %p45
      %s47 = ssub.s32 %s13, %s20
      %p48 = scmp.eq.s32.totalorder %s47, 0
      %s50 = sadd.s32 %s49, 1
      %s51 = scalar_select %p48, %s49, %s50
      %p54 = pneg %p48
      %p55 = scmp.eq.s32.totalorder %s13, 1
      %p56 = por %p54, %p55
      %p57 = scmp.ne.s32.totalorder %s49, %s52
      %p58 = scmp.eq.s32.totalorder %s13, 0
      %p59 = por %p57, %p58
      %p60 = scmp.ne.s32.totalorder %s49, %s52
      %p61 = scmp.eq.s32.totalorder %s18, 1
      %p62 = por %p60, %p61
      %p63 = scmp.ne.s32.totalorder %s52, %s53
      %p64 = scmp.eq.s32.totalorder %s18, 0
      %p65 = por %p63, %p64
      %p66 = scmp.ne.s32.totalorder %s52, %s53
      %p67 = scmp.eq.s32.totalorder %s19, 1
      %p68 = por %p66, %p67
      %p70 = scmp.ne.s32.totalorder %s53, %s69
      %p71 = scmp.eq.s32.totalorder %s19, 0
      %p72 = por %p70, %p71
      %p73 = scmp.le.s32.totalorder 1, %s13
      %p74 = scmp.lt.s32.totalorder %s13, 3
      %p75 = pnand %p73, %p74
      %p76 = pneg %p75
      // Predicated region
      $region9: #{tpu_custom_call.1} parent=5 // pred_check
        _
      $region10: #{tpu_custom_call.1} parent=5 // pred_check_branch
        %78 = sbr.rel (%p75) target = $region12
      $region11: #{tpu_custom_call.1} parent=5 // pred_region
        %s79 = ssub.s32 %s13, 1
      $region12: #{tpu_custom_call.1} parent=5 // pred_fallthru
        _
      %p80 = scmp.lt.s32.totalorder %s13, 2
      // Predicated region
      $region13: #{tpu_custom_call.1} parent=5 // pred_check
        %p81 = pneg %p80
      $region14: #{tpu_custom_call.1} parent=5 // pred_check_branch
        %83 = sbr.rel (%p81) target = $region16
      $region15: #{tpu_custom_call.1} parent=5 // pred_region
        // Predicated region
        $region17: #{tpu_custom_call.1} parent=15 // pred_check
          %p84 = pneg %p33
        $region18: #{tpu_custom_call.1} parent=15 // pred_check_branch
          %86 = sbr.rel (%p84) target = $region20
        $region19: #{tpu_custom_call.1} parent=15 // pred_region
          %s87 = sand.u32 %s23, 1
          %s88 = scalar_lea.sflag [#allocation3], %s87
          %s89 = sand.u32 %s23, 1
          %s90 = smul.addr %s89, 576
          %s91 = scalar_lea.vmem [#allocation2], %s90
          %s92 = smul.u32 72, %s13
          %s93 = ssub.s32 136, %s92
          %p94 = scmp.lt.s32.totalorder %s93, 72
          %s95 = scalar_select %p94, %s93, 72
          %s96 = smul.u32 128, %s95
          %s98 = ssub.s32 9216, %s96
          %99 = vsyncadd %s88, %s98
          %p100 = scmp.ne.s32.totalorder 0, %s96
          %s101 = smul.addr %s92, 128
          %s102 = scalar_lea.hbm %s0, %s101
          %s103 = smul.u32 8, %s95
          %s104 = sshll.u32 %s91, 4
          %s105 = int_to_ptr.vmem [resolvable:$true] %s104
          %s106 = sshll.u32 %s103, 4
          %110 = dma.hbm_to_vmem [thread:$0]  (%p100), %s102, %s106, %s105, %s88, 128, 128, 8
        $region20: #{tpu_custom_call.1} parent=15 // pred_fallthru
          _
      $region16: #{tpu_custom_call.1} parent=5 // pred_fallthru
        _
      %p111 = scmp.le.s32.totalorder 1, %s13
      %p112 = scmp.lt.s32.totalorder %s13, 3
      %p113 = pnand %p111, %p112
      %p114 = pneg %p113
      // Predicated region
      $region21: #{tpu_custom_call.1} parent=5 // pred_check
        _
      $region22: #{tpu_custom_call.1} parent=5 // pred_check_branch
        %116 = sbr.rel (%p113) target = $region24
      $region23: #{tpu_custom_call.1} parent=5 // pred_region
        %s117 = ssub.s32 %s13, 1
        %s118 = sand.u32 %s26, 1
        %s119 = scalar_lea.sflag [#allocation3], %s118
        %s120 = sand.u32 %s26, 1
        %s121 = smul.addr %s120, 576
        %s122 = scalar_lea.vmem [#allocation2], %s121
        // Predicated region
        $region25: #{tpu_custom_call.1} parent=23 // pred_check
          %p123 = pneg %p39
        $region26: #{tpu_custom_call.1} parent=23 // pred_check_branch
          %125 = sbr.rel (%p123) target = $region28
        $region27: #{tpu_custom_call.1} parent=23 // pred_region
          %126 = dma.done %s119, 9216
        $region28: #{tpu_custom_call.1} parent=23 // pred_fallthru
          _
        %s127 = sand.u32 %s26, 1
        %s128 = scalar_lea.sflag [#allocation3], %s127
        %s129 = sand.u32 %s26, 1
        %s130 = smul.addr %s129, 576
        %s131 = scalar_lea.vmem [#allocation2], %s130
        %p132 = pneg %p39
        %p133 = pneg %p36
        %p134 = pneg %p65
        %p135 = pneg %p62
        %s136 = sand.u32 %s52, 1
        %s137 = scalar_lea.sflag [#allocation4], %s136
        %s138 = sand.u32 %s52, 1
        %s139 = smul.addr %s138, 8
        %s140 = scalar_lea.vmem [#allocation5], %s139
        %s141 = smul.u32 72, %s18
        %s142 = ssub.s32 136, %s141
        %p143 = scmp.lt.s32.totalorder %s142, 72
        %s144 = scalar_select %p143, %s142, 72
        %s145 = smul.u32 128, %s144
        %p146 = scmp.eq.s32.totalorder %s18, 1
        %p147 = scmp.ne.s32.totalorder %s18, 1
        // Predicated region
        $region29: #{tpu_custom_call.1} parent=23 // pred_check
          %p148 = pneg %p147
        $region30: #{tpu_custom_call.1} parent=23 // pred_check_branch
          %150 = sbr.rel (%p148) target = $region32
        $region31: #{tpu_custom_call.1} parent=23 // pred_region
          loop: start=0, step=1, limit=4
          $region33: #{tpu_custom_call.1} parent=31 // loop_pre_header
            _
          $region34: #{tpu_custom_call.1} parent=31 // loop_header
            %s152 = sphi 0, %s156
            %p153 = scmp.ge.s32.totalorder %s152, 4
            %v157 = vphi 0.0, %v224
          $region35: #{tpu_custom_call.1} parent=31 // loop_header_branch
            %155 = sbr.rel (%p153) target = $region39
          $region36: #{tpu_custom_call.1} parent=31 // loop_body
            %s158 = smul.u32 %s152, 16
            %s159 = smul.u32 %s158, 8
            %s160 = scalar_lea.vmem %s122, %s159 [#allocation2]
            %v161 = vld [vmem:[%s160] sm:$0xff]
            %v162 = vld [vmem:[%s160 + $0x8] sm:$0xff]
            %v163 = vld [vmem:[%s160 + $0x10] sm:$0xff]
            %v164 = vld [vmem:[%s160 + $0x18] sm:$0xff]
            %v165 = vld [vmem:[%s160 + $0x20] sm:$0xff]
            %v166 = vld [vmem:[%s160 + $0x28] sm:$0xff]
            %v167 = vld [vmem:[%s160 + $0x30] sm:$0xff]
            %v168 = vld [vmem:[%s160 + $0x38] sm:$0xff]
            %v169 = vld [vmem:[%s160 + $0x40] sm:$0xff]
            %v170 = vld [vmem:[%s160 + $0x48] sm:$0xff]
            %v171 = vld [vmem:[%s160 + $0x50] sm:$0xff]
            %v172 = vld [vmem:[%s160 + $0x58] sm:$0xff]
            %v173 = vld [vmem:[%s160 + $0x60] sm:$0xff]
            %v174 = vld [vmem:[%s160 + $0x68] sm:$0xff]
            %v175 = vld [vmem:[%s160 + $0x70] sm:$0xff]
            %v176 = vld [vmem:[%s160 + $0x78] sm:$0xff]
            %v177 = vsub.f32 %v161, 1.0
            %v178 = vsub.f32 %v162, 1.0
            %v179 = vsub.f32 %v163, 1.0
            %v180 = vsub.f32 %v164, 1.0
            %v181 = vsub.f32 %v165, 1.0
            %v182 = vsub.f32 %v166, 1.0
            %v183 = vsub.f32 %v167, 1.0
            %v184 = vsub.f32 %v168, 1.0
            %v185 = vsub.f32 %v169, 1.0
            %v186 = vsub.f32 %v170, 1.0
            %v187 = vsub.f32 %v171, 1.0
            %v188 = vsub.f32 %v172, 1.0
            %v189 = vsub.f32 %v173, 1.0
            %v190 = vsub.f32 %v174, 1.0
            %v191 = vsub.f32 %v175, 1.0
            %v192 = vsub.f32 %v176, 1.0
            %v193 = vmul.f32 %v177, %v177
            %v194 = vmul.f32 %v178, %v178
            %v195 = vmul.f32 %v179, %v179
            %v196 = vmul.f32 %v180, %v180
            %v197 = vmul.f32 %v181, %v181
            %v198 = vmul.f32 %v182, %v182
            %v199 = vmul.f32 %v183, %v183
            %v200 = vmul.f32 %v184, %v184
            %v201 = vmul.f32 %v185, %v185
            %v202 = vmul.f32 %v186, %v186
            %v203 = vmul.f32 %v187, %v187
            %v204 = vmul.f32 %v188, %v188
            %v205 = vmul.f32 %v189, %v189
            %v206 = vmul.f32 %v190, %v190
            %v207 = vmul.f32 %v191, %v191
            %v208 = vmul.f32 %v192, %v192
            %v209 = vadd.f32 %v193, %v194
            %v210 = vadd.f32 %v209, %v195
            %v211 = vadd.f32 %v210, %v196
            %v212 = vadd.f32 %v211, %v197
            %v213 = vadd.f32 %v212, %v198
            %v214 = vadd.f32 %v213, %v199
            %v215 = vadd.f32 %v214, %v200
            %v216 = vadd.f32 %v215, %v201
            %v217 = vadd.f32 %v216, %v202
            %v218 = vadd.f32 %v217, %v203
            %v219 = vadd.f32 %v218, %v204
            %v220 = vadd.f32 %v219, %v205
            %v221 = vadd.f32 %v220, %v206
            %v222 = vadd.f32 %v221, %v207
            %v223 = vadd.f32 %v222, %v208
            %v224 = vadd.f32 %v157, %v223
          $region37: #{tpu_custom_call.1} parent=31 // loop_footer
            %s156 = sadd.s32 1, %s152
          $region38: #{tpu_custom_call.1} parent=31 // loop_footer_branch
            %151 = sbr.rel target = $region34
          $region39: #{tpu_custom_call.1} parent=31 // loop_exit
            _
          %s225 = scalar_lea.vmem %s122, 512 [#allocation2]
          %v226 = vld [vmem:[%s225] sm:$0xff]
          %v227 = vld [vmem:[%s225 + $0x8] sm:$0xff]
          %v228 = vld [vmem:[%s225 + $0x10] sm:$0xff]
          %v229 = vld [vmem:[%s225 + $0x18] sm:$0xff]
          %v230 = vld [vmem:[%s225 + $0x20] sm:$0xff]
          %v231 = vld [vmem:[%s225 + $0x28] sm:$0xff]
          %v232 = vld [vmem:[%s225 + $0x30] sm:$0xff]
          %v233 = vld [vmem:[%s225 + $0x38] sm:$0xff]
          %v234 = vsub.f32 %v226, 1.0
          %v235 = vsub.f32 %v227, 1.0
          %v236 = vsub.f32 %v228, 1.0
          %v237 = vsub.f32 %v229, 1.0
          %v238 = vsub.f32 %v230, 1.0
          %v239 = vsub.f32 %v231, 1.0
          %v240 = vsub.f32 %v232, 1.0
          %v241 = vsub.f32 %v233, 1.0
          %v242 = vmul.f32 %v234, %v234
          %v243 = vmul.f32 %v235, %v235
          %v244 = vmul.f32 %v236, %v236
          %v245 = vmul.f32 %v237, %v237
          %v246 = vmul.f32 %v238, %v238
          %v247 = vmul.f32 %v239, %v239
          %v248 = vmul.f32 %v240, %v240
          %v249 = vmul.f32 %v241, %v241
          %v250 = vadd.f32 %v242, %v243
          %v251 = vadd.f32 %v250, %v244
          %v252 = vadd.f32 %v251, %v245
          %v253 = vadd.f32 %v252, %v246
          %v254 = vadd.f32 %v253, %v247
          %v255 = vadd.f32 %v254, %v248
          %v256 = vadd.f32 %v255, %v249
          %v257 = vadd.f32 %v157, %v256
          %258 = vst [vmem:[%s140] sm:$0xff] %v257
        $region32: #{tpu_custom_call.1} parent=23 // pred_fallthru
          _
        // Predicated region
        $region40: #{tpu_custom_call.1} parent=23 // pred_check
          %p259 = pneg %p146
        $region41: #{tpu_custom_call.1} parent=23 // pred_check_branch
          %261 = sbr.rel (%p259) target = $region43
        $region42: #{tpu_custom_call.1} parent=23 // pred_region
          loop: start=0, step=1, limit=4
          $region44: #{tpu_custom_call.1} parent=42 // loop_pre_header
            _
          $region45: #{tpu_custom_call.1} parent=42 // loop_header
            %s263 = sphi 0, %s267
            %p264 = scmp.ge.s32.totalorder %s263, 4
            %v268 = vphi 0.0, %v335
          $region46: #{tpu_custom_call.1} parent=42 // loop_header_branch
            %266 = sbr.rel (%p264) target = $region50
          $region47: #{tpu_custom_call.1} parent=42 // loop_body
            %s269 = smul.u32 %s263, 16
            %s270 = smul.u32 %s269, 8
            %s271 = scalar_lea.vmem %s122, %s270 [#allocation2]
            %v272 = vld [vmem:[%s271] sm:$0xff]
            %v273 = vld [vmem:[%s271 + $0x8] sm:$0xff]
            %v274 = vld [vmem:[%s271 + $0x10] sm:$0xff]
            %v275 = vld [vmem:[%s271 + $0x18] sm:$0xff]
            %v276 = vld [vmem:[%s271 + $0x20] sm:$0xff]
            %v277 = vld [vmem:[%s271 + $0x28] sm:$0xff]
            %v278 = vld [vmem:[%s271 + $0x30] sm:$0xff]
            %v279 = vld [vmem:[%s271 + $0x38] sm:$0xff]
            %v280 = vld [vmem:[%s271 + $0x40] sm:$0xff]
            %v281 = vld [vmem:[%s271 + $0x48] sm:$0xff]
            %v282 = vld [vmem:[%s271 + $0x50] sm:$0xff]
            %v283 = vld [vmem:[%s271 + $0x58] sm:$0xff]
            %v284 = vld [vmem:[%s271 + $0x60] sm:$0xff]
            %v285 = vld [vmem:[%s271 + $0x68] sm:$0xff]
            %v286 = vld [vmem:[%s271 + $0x70] sm:$0xff]
            %v287 = vld [vmem:[%s271 + $0x78] sm:$0xff]
            %v288 = vsub.f32 %v272, 1.0
            %v289 = vsub.f32 %v273, 1.0
            %v290 = vsub.f32 %v274, 1.0
            %v291 = vsub.f32 %v275, 1.0
            %v292 = vsub.f32 %v276, 1.0
            %v293 = vsub.f32 %v277, 1.0
            %v294 = vsub.f32 %v278, 1.0
            %v295 = vsub.f32 %v279, 1.0
            %v296 = vsub.f32 %v280, 1.0
            %v297 = vsub.f32 %v281, 1.0
            %v298 = vsub.f32 %v282, 1.0
            %v299 = vsub.f32 %v283, 1.0
            %v300 = vsub.f32 %v284, 1.0
            %v301 = vsub.f32 %v285, 1.0
            %v302 = vsub.f32 %v286, 1.0
            %v303 = vsub.f32 %v287, 1.0
            %v304 = vmul.f32 %v288, %v288
            %v305 = vmul.f32 %v289, %v289
            %v306 = vmul.f32 %v290, %v290
            %v307 = vmul.f32 %v291, %v291
            %v308 = vmul.f32 %v292, %v292
            %v309 = vmul.f32 %v293, %v293
            %v310 = vmul.f32 %v294, %v294
            %v311 = vmul.f32 %v295, %v295
            %v312 = vmul.f32 %v296, %v296
            %v313 = vmul.f32 %v297, %v297
            %v314 = vmul.f32 %v298, %v298
            %v315 = vmul.f32 %v299, %v299
            %v316 = vmul.f32 %v300, %v300
            %v317 = vmul.f32 %v301, %v301
            %v318 = vmul.f32 %v302, %v302
            %v319 = vmul.f32 %v303, %v303
            %v320 = vadd.f32 %v304, %v305
            %v321 = vadd.f32 %v320, %v306
            %v322 = vadd.f32 %v321, %v307
            %v323 = vadd.f32 %v322, %v308
            %v324 = vadd.f32 %v323, %v309
            %v325 = vadd.f32 %v324, %v310
            %v326 = vadd.f32 %v325, %v311
            %v327 = vadd.f32 %v326, %v312
            %v328 = vadd.f32 %v327, %v313
            %v329 = vadd.f32 %v328, %v314
            %v330 = vadd.f32 %v329, %v315
            %v331 = vadd.f32 %v330, %v316
            %v332 = vadd.f32 %v331, %v317
            %v333 = vadd.f32 %v332, %v318
            %v334 = vadd.f32 %v333, %v319
            %v335 = vadd.f32 %v268, %v334
          $region48: #{tpu_custom_call.1} parent=42 // loop_footer
            %s267 = sadd.s32 1, %s263
          $region49: #{tpu_custom_call.1} parent=42 // loop_footer_branch
            %262 = sbr.rel target = $region45
          $region50: #{tpu_custom_call.1} parent=42 // loop_exit
            _
          %336 = vst [vmem:[%s140] sm:$0xff] %v268
        $region43: #{tpu_custom_call.1} parent=23 // pred_fallthru
          _
        %s337 = sand.u32 %s52, 1
        %s338 = scalar_lea.sflag [#allocation4], %s337
        %s339 = sand.u32 %s52, 1
        %s340 = smul.addr %s339, 8
        %s341 = scalar_lea.vmem [#allocation5], %s340
        // Predicated region
        $region51: #{tpu_custom_call.1} parent=23 // pred_check
          %p342 = pneg %p62
        $region52: #{tpu_custom_call.1} parent=23 // pred_check_branch
          %344 = sbr.rel (%p342) target = $region54
        $region53: #{tpu_custom_call.1} parent=23 // pred_region
          %s346 = ssub.s32 128, 128
          %347 = vsyncadd %s338, %s346
          %s348 = smul.addr %s18, 128
          %s349 = scalar_lea.hbm %s1, %s348
          %s351 = sshll.u32 %s341, 4
          %s352 = int_to_ptr.vmem [resolvable:$true] %s351
          %354 = dma.vmem_to_hbm [thread:$0]  %s352, 128, %s349, %s338
        $region54: #{tpu_custom_call.1} parent=23 // pred_fallthru
          _
      $region24: #{tpu_custom_call.1} parent=5 // pred_fallthru
        _
      %p355 = scmp.le.s32.totalorder 2, %s13
      // Predicated region
      $region55: #{tpu_custom_call.1} parent=5 // pred_check
        %p356 = pneg %p355
      $region56: #{tpu_custom_call.1} parent=5 // pred_check_branch
        %358 = sbr.rel (%p356) target = $region58
      $region57: #{tpu_custom_call.1} parent=5 // pred_region
        %s359 = ssub.s32 %s13, 2
        // Predicated region
        $region59: #{tpu_custom_call.1} parent=57 // pred_check
          %p360 = pneg %p68
        $region60: #{tpu_custom_call.1} parent=57 // pred_check_branch
          %362 = sbr.rel (%p360) target = $region62
        $region61: #{tpu_custom_call.1} parent=57 // pred_region
          %s363 = sand.u32 %s53, 1
          %s364 = scalar_lea.sflag [#allocation4], %s363
          %s365 = sand.u32 %s53, 1
          %s366 = smul.addr %s365, 8
          %s367 = scalar_lea.vmem [#allocation5], %s366
          %368 = dma.done %s364, 128
        $region62: #{tpu_custom_call.1} parent=57 // pred_fallthru
          _
      $region58: #{tpu_custom_call.1} parent=5 // pred_fallthru
        _
    $region6: #{tpu_custom_call.1} parent=1 // loop_footer
      %s17 = sadd.s32 1, %s13
    $region7: #{tpu_custom_call.1} parent=1 // loop_footer_branch
      %12 = sbr.rel target = $region3
    $region8: #{tpu_custom_call.1} parent=1 // loop_exit
      _
    %369 = vsyncpa [#allocation3], 1
    %s370 = scalar_lea.sflag [#allocation3], 1
    %371 = vsyncpa %s370, 1
    %372 = vsyncpa [#allocation4], 1
    %s373 = scalar_lea.sflag [#allocation4], 1
    %374 = vsyncpa %s373, 1

</llo_original>
